<compile_context>
chip_gen: v5e
topology: v5e:2x2
jax: 0.10.0
libtpu: 0.0.40
codegen_flags: <defaults>
</compile_context>

<pallas_src>
import functools
import math

import jax
import jax.numpy as jnp
from jax.experimental import pallas as pl
from jax.experimental.pallas import tpu as pltpu


def _round_up(x, m):
    return ((x + m - 1) // m) * m


def _gmm_time_kernel(
    x1_ref, x2_ref, x3_ref, t_ref,
    w1a_ref, w1b_ref, w1c_ref, b1_ref,
    wh1_ref, bh1_ref, wh2_ref, bh2_ref,
    mse_ref, sumres_ref, tp_ref, tg_ref,
    sq_acc, res_acc,
    *, n_comp, tile_b, n_valid,
):
    i = pl.program_id(0)

    @pl.when(i == 0)
    def _init():
        sq_acc[...] = jnp.zeros_like(sq_acc)
        res_acc[...] = jnp.zeros_like(res_acc)

    # f = ReLU(cat(x1,x2,x3) @ W1 + b1) computed as three partial dots, so the
    # wrapper never materializes the concatenated activation in HBM.
    f = (
        jnp.dot(x1_ref[...], w1a_ref[...], preferred_element_type=jnp.float32)
        + jnp.dot(x2_ref[...], w1b_ref[...], preferred_element_type=jnp.float32)
        + jnp.dot(x3_ref[...], w1c_ref[...], preferred_element_type=jnp.float32)
        + b1_ref[...]
    )
    f = jnp.maximum(f, 0.0)                                            # (TB, D4)

    # Fused first layers of the three heads -> (TB, 3*D4)
    h = jnp.dot(f, wh1_ref[...], preferred_element_type=jnp.float32) + bh1_ref[...]
    h = jnp.maximum(h, 0.0)

    # Fused (block-diagonal) second layers -> (TB, 3*N) = [mu | logvar | logits]
    heads = jnp.dot(h, wh2_ref[...], preferred_element_type=jnp.float32) + bh2_ref[...]
    mu = heads[:, 0:n_comp]                                            # (TB, N)
    logvar = heads[:, n_comp:2 * n_comp]                               # (TB, N)
    logits = heads[:, 2 * n_comp:3 * n_comp]                           # (TB, N)

    var = jnp.exp(logvar)                                              # (TB, N)

    # softmax over mixture components
    logits = logits - jnp.max(logits, axis=-1, keepdims=True)
    e = jnp.exp(logits)
    weight = e * pl.reciprocal(jnp.sum(e, axis=-1, keepdims=True))     # (TB, N)

    # t += 1 ; t = log(t)
    t_log = jnp.log(t_ref[...] + 1.0)                                  # (TB, 1)

    inv_prec = jax.lax.rsqrt(var * (2.0 * math.pi))                    # 1/sqrt(2*pi*var)
    quad = mu * mu + t_log * t_log - 2.0 * t_log * mu                  # (TB, N)
    log_p = jnp.exp(-quad / (2.0 * var)) * inv_prec * weight

    result = -jnp.log(jnp.sum(log_p, axis=1, keepdims=True))           # (TB, 1)
    time_pred = jnp.sum(mu * weight, axis=1, keepdims=True)            # (TB, 1)

    # Mask padded batch rows out of the reductions.
    rows = i * tile_b + jax.lax.broadcasted_iota(jnp.int32, (tile_b, 1), 0)
    valid = rows < n_valid
    diff = jnp.where(valid, time_pred - t_log, 0.0)
    res_m = jnp.where(valid, result, 0.0)

    sq_acc[...] += jnp.sum(diff * diff, axis=(0, 1), keepdims=True)
    res_acc[...] += jnp.sum(res_m, axis=(0, 1), keepdims=True)

    # Lane-dense per-row outputs: (1, TB).
    tp_ref[...] = time_pred.reshape(1, tile_b)
    tg_ref[...] = t_log.reshape(1, tile_b)

    @pl.when(i == pl.num_programs(0) - 1)
    def _finalize():
        mse_ref[...] = jnp.sqrt(sq_acc[...])       # torch.norm(diff, 2)
        sumres_ref[...] = res_acc[...]


def final_classifier_time_prediction(x1, x2, x3, t, params):
    """Pallas wrapper. Returns (MSE, sum(result), [time_predicted, time_gt])."""
    x1 = x1.astype(jnp.float32)
    x2 = x2.astype(jnp.float32)
    x3 = x3.astype(jnp.float32)
    B = x1.shape[0]
    d1, d2, d3 = x1.shape[1], x2.shape[1], x3.shape[1]
    dim4 = params["w1"].shape[1]
    N = params["wm2"].shape[1]

    # Tile the batch. 512 rows keeps the pipeline long while staying far below
    # even v7x's 64 MiB VMEM (inputs are ~50 KiB per buffer per tile).
    TILE_B = 512 if B >= 512 else _round_up(B, 8)
    num_tiles = -(-B // TILE_B)
    B_pad = num_tiles * TILE_B

    t2d = t.reshape(B, 1).astype(jnp.float32)
    if B_pad != B:
        pad = B_pad - B
        x1 = jnp.pad(x1, ((0, pad), (0, 0)))
        x2 = jnp.pad(x2, ((0, pad), (0, 0)))
        x3 = jnp.pad(x3, ((0, pad), (0, 0)))
        t2d = jnp.pad(t2d, ((0, pad), (0, 0)))

    # Split first-layer weight along its input dim (avoids concat of x1..x3).
    w1 = params["w1"].astype(jnp.float32)
    w1a, w1b, w1c = w1[:d1], w1[d1:d1 + d2], w1[d1 + d2:]

    # Fuse the three heads: first layers side-by-side, second layers block-diag.
    wh1 = jnp.concatenate(
        [params["wm1"], params["wv1"], params["ww1"]], axis=1).astype(jnp.float32)
    bh1 = jnp.concatenate(
        [params["bm1"], params["bv1"], params["bw1"]], axis=1).astype(jnp.float32)
    wh2 = jnp.zeros((3 * dim4, 3 * N), jnp.float32)
    wh2 = wh2.at[0:dim4, 0:N].set(params["wm2"])
    wh2 = wh2.at[dim4:2 * dim4, N:2 * N].set(params["wv2"])
    wh2 = wh2.at[2 * dim4:, 2 * N:].set(params["ww2"])
    bh2 = jnp.concatenate(
        [params["bm2"], params["bv2"], params["bw2"]], axis=1).astype(jnp.float32)

    def const2(i):
        return (0, 0)

    def batch2(i):
        return (i, 0)

    def lane2(i):
        return (0, i)

    weight_arrays = (w1a, w1b, w1c, params["b1"].astype(jnp.float32),
                     wh1, bh1, wh2, bh2)

    in_specs = [
        pl.BlockSpec((TILE_B, d1), batch2),
        pl.BlockSpec((TILE_B, d2), batch2),
        pl.BlockSpec((TILE_B, d3), batch2),
        pl.BlockSpec((TILE_B, 1), batch2),
    ] + [pl.BlockSpec(w.shape, const2) for w in weight_arrays]

    out_shapes = (
        jax.ShapeDtypeStruct((1, 1), jnp.float32),       # MSE (L2 norm)
        jax.ShapeDtypeStruct((1, 1), jnp.float32),       # sum(result)
        jax.ShapeDtypeStruct((1, B_pad), jnp.float32),   # time_predicted (lane-dense)
        jax.ShapeDtypeStruct((1, B_pad), jnp.float32),   # time_gt (lane-dense)
    )
    out_specs = (
        pl.BlockSpec((1, 1), const2),
        pl.BlockSpec((1, 1), const2),
        pl.BlockSpec((1, TILE_B), lane2),
        pl.BlockSpec((1, TILE_B), lane2),
    )

    kernel = functools.partial(
        _gmm_time_kernel, n_comp=N, tile_b=TILE_B, n_valid=B)

    mse, sum_res, tp, tg = pl.pallas_call(
        kernel,
        out_shape=out_shapes,
        grid_spec=pltpu.PrefetchScalarGridSpec(
            num_scalar_prefetch=0,
            grid=(num_tiles,),
            in_specs=in_specs,
            out_specs=out_specs,
            scratch_shapes=[pltpu.VMEM((1, 1), jnp.float32),   # sum(diff^2)
                            pltpu.VMEM((1, 1), jnp.float32)],  # sum(result)
        ),
        # The batch axis carries the scalar accumulators -> "arbitrary".
        # TODO(synk): for v7x dual-TC, emit per-tile partial sums with a
        # "parallel" axis and reduce in the wrapper.
        compiler_params=pltpu.CompilerParams(
            dimension_semantics=("arbitrary",)),
    )(x1, x2, x3, t2d, *weight_arrays)

    return mse[0, 0], sum_res[0, 0], [tp[0, :B], tg[0, :B]]


def init_params(key, dim1, dim2, dim3, dim4, N=3):
    """Deterministic synthetic init (xavier-normal-style weights, zero biases)."""
    d_in = dim1 + dim2 + dim3

    def xavier(k, fan_in, fan_out):
        std = math.sqrt(2.0 / (fan_in + fan_out))
        return std * jax.random.normal(k, (fan_in, fan_out), dtype=jnp.float32)

    keys = jax.random.split(key, 7)
    params = {
        "w1": xavier(keys[0], d_in, dim4), "b1": jnp.zeros((1, dim4), jnp.float32),
        "wm1": xavier(keys[1], dim4, dim4), "bm1": jnp.zeros((1, dim4), jnp.float32),
        "wm2": xavier(keys[2], dim4, N),    "bm2": jnp.zeros((1, N), jnp.float32),
        "wv1": xavier(keys[3], dim4, dim4), "bv1": jnp.zeros((1, dim4), jnp.float32),
        "wv2": xavier(keys[4], dim4, N),    "bv2": jnp.zeros((1, N), jnp.float32),
        "ww1": xavier(keys[5], dim4, dim4), "bw1": jnp.zeros((1, dim4), jnp.float32),
        "ww2": xavier(keys[6], dim4, N),    "bw2": jnp.zeros((1, N), jnp.float32),
    }
    return params


if __name__ == "__main__":
    dim1, dim2, dim3, dim4, N = 8, 8, 16, 32, 3
    B = 8

    key = jax.random.PRNGKey(0)
    kp, k1, k2, k3, kt = jax.random.split(key, 5)

    params = init_params(kp, dim1, dim2, dim3, dim4, N)
    x1 = jax.random.normal(k1, (B, dim1), dtype=jnp.float32)
    x2 = jax.random.normal(k2, (B, dim2), dtype=jnp.float32)
    x3 = jax.random.normal(k3, (B, dim3), dtype=jnp.float32)
    # positive time targets (so log(t+1) is well defined, matching typical usage)
    t = jax.random.uniform(kt, (B,), dtype=jnp.float32, minval=0.1, maxval=5.0)

    mse, sum_result, (time_pred, time_gt) = final_classifier_time_prediction(
        x1, x2, x3, t, params
    )
    jax.block_until_ready((mse, sum_result, time_pred, time_gt))
    print("KERNEL_OK")
</pallas_src>

<mosaic_0001>
module attributes {stable_mosaic.version = 11 : i64} {
  func.func @_gmm_time_kernel(%arg0: i32, %arg1: memref<8x8xf32, #tpu.memory_space<vmem>>, %arg2: memref<8x8xf32, #tpu.memory_space<vmem>>, %arg3: memref<8x16xf32, #tpu.memory_space<vmem>>, %arg4: memref<8x1xf32, #tpu.memory_space<vmem>>, %arg5: memref<8x32xf32, #tpu.memory_space<vmem>>, %arg6: memref<8x32xf32, #tpu.memory_space<vmem>>, %arg7: memref<16x32xf32, #tpu.memory_space<vmem>>, %arg8: memref<1x32xf32, #tpu.memory_space<vmem>>, %arg9: memref<32x96xf32, #tpu.memory_space<vmem>>, %arg10: memref<1x96xf32, #tpu.memory_space<vmem>>, %arg11: memref<96x9xf32, #tpu.memory_space<vmem>>, %arg12: memref<1x9xf32, #tpu.memory_space<vmem>>, %arg13: memref<1x1xf32, #tpu.memory_space<vmem>>, %arg14: memref<1x1xf32, #tpu.memory_space<vmem>>, %arg15: memref<1x8xf32, #tpu.memory_space<vmem>>, %arg16: memref<1x8xf32, #tpu.memory_space<vmem>>, %arg17: memref<1x1xf32, #tpu.memory_space<vmem>>, %arg18: memref<1x1xf32, #tpu.memory_space<vmem>>) attributes {dimension_semantics = [#tpu.dimension_semantics<arbitrary>], iteration_bounds = array<i64: 1>, scalar_prefetch = 0 : i64, scratch_operands = 2 : i64, tpu.core_type = #tpu.core_type<tc>, window_params = [{transform_indices = @transform_0, window_bounds = array<i64: 8, 8>}, {transform_indices = @transform_1, window_bounds = array<i64: 8, 8>}, {transform_indices = @transform_2, window_bounds = array<i64: 8, 16>}, {transform_indices = @transform_3, window_bounds = array<i64: 8, 1>}, {pipeline_mode = #tpu.pipeline_mode<synchronous>, transform_indices = @transform_4, window_bounds = array<i64: 8, 32>}, {pipeline_mode = #tpu.pipeline_mode<synchronous>, transform_indices = @transform_5, window_bounds = array<i64: 8, 32>}, {pipeline_mode = #tpu.pipeline_mode<synchronous>, transform_indices = @transform_6, window_bounds = array<i64: 16, 32>}, {pipeline_mode = #tpu.pipeline_mode<synchronous>, transform_indices = @transform_7, window_bounds = array<i64: 1, 32>}, {pipeline_mode = #tpu.pipeline_mode<synchronous>, transform_indices = @transform_8, window_bounds = array<i64: 32, 96>}, {pipeline_mode = #tpu.pipeline_mode<synchronous>, transform_indices = @transform_9, window_bounds = array<i64: 1, 96>}, {pipeline_mode = #tpu.pipeline_mode<synchronous>, transform_indices = @transform_10, window_bounds = array<i64: 96, 9>}, {pipeline_mode = #tpu.pipeline_mode<synchronous>, transform_indices = @transform_11, window_bounds = array<i64: 1, 9>}, {pipeline_mode = #tpu.pipeline_mode<synchronous>, transform_indices = @transform_12, window_bounds = array<i64: 1, 1>}, {pipeline_mode = #tpu.pipeline_mode<synchronous>, transform_indices = @transform_13, window_bounds = array<i64: 1, 1>}, {transform_indices = @transform_14, window_bounds = array<i64: 1, 8>}, {transform_indices = @transform_15, window_bounds = array<i64: 1, 8>}]} {
    %c0_i32 = arith.constant 0 : i32
    %0 = arith.cmpi eq, %arg0, %c0_i32 : i32
    %1 = arith.extui %0 : i1 to i32
    %c0_i32_0 = arith.constant 0 : i32
    %2 = arith.cmpi ne, %1, %c0_i32_0 : i32
    scf.if %2 {
      %cst_59 = arith.constant 0.000000e+00 : f32
      %112 = vector.broadcast %cst_59 : f32 to vector<1x1xf32>
      %c0_60 = arith.constant 0 : index
      %c0_61 = arith.constant 0 : index
      %113 = vector.load %arg17[%c0_60, %c0_61] : memref<1x1xf32, #tpu.memory_space<vmem>>, vector<1x1xf32>
      tpu.vector_store %arg17[%c0_60, %c0_61], %112 {strides = array<i32>} : memref<1x1xf32, #tpu.memory_space<vmem>>, vector<1x1xf32>,
      %cst_62 = arith.constant 0.000000e+00 : f32
      %114 = vector.broadcast %cst_62 : f32 to vector<1x1xf32>
      %c0_63 = arith.constant 0 : index
      %c0_64 = arith.constant 0 : index
      %115 = vector.load %arg18[%c0_63, %c0_64] : memref<1x1xf32, #tpu.memory_space<vmem>>, vector<1x1xf32>
      tpu.vector_store %arg18[%c0_63, %c0_64], %114 {strides = array<i32>} : memref<1x1xf32, #tpu.memory_space<vmem>>, vector<1x1xf32>,
    } else {
    }
    %c0 = arith.constant 0 : index
    %c0_1 = arith.constant 0 : index
    %3 = vector.load %arg1[%c0, %c0_1] : memref<8x8xf32, #tpu.memory_space<vmem>>, vector<8x8xf32>
    %c0_2 = arith.constant 0 : index
    %c0_3 = arith.constant 0 : index
    %4 = vector.load %arg5[%c0_2, %c0_3] : memref<8x32xf32, #tpu.memory_space<vmem>>, vector<8x32xf32>
    %cst = arith.constant dense<0.000000e+00> : vector<8x32xf32>
    %5 = tpu.matmul %3, %4, %cst {dimension_numbers = #tpu.dot_dimension_numbers<[1], [0], [0], [1], [0, 0, 1, 1], [], []>} : vector<8x8xf32>, vector<8x32xf32>, vector<8x32xf32> -> vector<8x32xf32>
    %c0_4 = arith.constant 0 : index
    %c0_5 = arith.constant 0 : index
    %6 = vector.load %arg2[%c0_4, %c0_5] : memref<8x8xf32, #tpu.memory_space<vmem>>, vector<8x8xf32>
    %c0_6 = arith.constant 0 : index
    %c0_7 = arith.constant 0 : index
    %7 = vector.load %arg6[%c0_6, %c0_7] : memref<8x32xf32, #tpu.memory_space<vmem>>, vector<8x32xf32>
    %cst_8 = arith.constant dense<0.000000e+00> : vector<8x32xf32>
    %8 = tpu.matmul %6, %7, %cst_8 {dimension_numbers = #tpu.dot_dimension_numbers<[1], [0], [0], [1], [0, 0, 1, 1], [], []>} : vector<8x8xf32>, vector<8x32xf32>, vector<8x32xf32> -> vector<8x32xf32>
    %9 = arith.addf %5, %8 : vector<8x32xf32>
    %c0_9 = arith.constant 0 : index
    %c0_10 = arith.constant 0 : index
    %10 = vector.load %arg3[%c0_9, %c0_10] : memref<8x16xf32, #tpu.memory_space<vmem>>, vector<8x16xf32>
    %c0_11 = arith.constant 0 : index
    %c0_12 = arith.constant 0 : index
    %11 = vector.load %arg7[%c0_11, %c0_12] : memref<16x32xf32, #tpu.memory_space<vmem>>, vector<16x32xf32>
    %cst_13 = arith.constant dense<0.000000e+00> : vector<8x32xf32>
    %12 = tpu.matmul %10, %11, %cst_13 {dimension_numbers = #tpu.dot_dimension_numbers<[1], [0], [0], [1], [0, 0, 1, 1], [], []>} : vector<8x16xf32>, vector<16x32xf32>, vector<8x32xf32> -> vector<8x32xf32>
    %13 = arith.addf %9, %12 : vector<8x32xf32>
    %c0_14 = arith.constant 0 : index
    %c0_15 = arith.constant 0 : index
    %14 = vector.load %arg8[%c0_14, %c0_15] : memref<1x32xf32, #tpu.memory_space<vmem>>, vector<1x32xf32>
    %15 = vector.broadcast %14 : vector<1x32xf32> to vector<8x32xf32>
    %16 = arith.addf %13, %15 : vector<8x32xf32>
    %cst_16 = arith.constant 0.000000e+00 : f32
    %17 = vector.broadcast %cst_16 : f32 to vector<8x32xf32>
    %18 = arith.maximumf %16, %17 : vector<8x32xf32>
    %c0_17 = arith.constant 0 : index
    %c0_18 = arith.constant 0 : index
    %19 = vector.load %arg9[%c0_17, %c0_18] : memref<32x96xf32, #tpu.memory_space<vmem>>, vector<32x96xf32>
    %cst_19 = arith.constant dense<0.000000e+00> : vector<8x96xf32>
    %20 = tpu.matmul %18, %19, %cst_19 {dimension_numbers = #tpu.dot_dimension_numbers<[1], [0], [0], [1], [0, 0, 1, 1], [], []>} : vector<8x32xf32>, vector<32x96xf32>, vector<8x96xf32> -> vector<8x96xf32>
    %c0_20 = arith.constant 0 : index
    %c0_21 = arith.constant 0 : index
    %21 = vector.load %arg10[%c0_20, %c0_21] : memref<1x96xf32, #tpu.memory_space<vmem>>, vector<1x96xf32>
    %22 = vector.broadcast %21 : vector<1x96xf32> to vector<8x96xf32>
    %23 = arith.addf %20, %22 : vector<8x96xf32>
    %cst_22 = arith.constant 0.000000e+00 : f32
    %24 = vector.broadcast %cst_22 : f32 to vector<8x96xf32>
    %25 = arith.maximumf %23, %24 : vector<8x96xf32>
    %c0_23 = arith.constant 0 : index
    %c0_24 = arith.constant 0 : index
    %26 = vector.load %arg11[%c0_23, %c0_24] : memref<96x9xf32, #tpu.memory_space<vmem>>, vector<96x9xf32>
    %cst_25 = arith.constant dense<0.000000e+00> : vector<8x9xf32>
    %27 = tpu.matmul %25, %26, %cst_25 {dimension_numbers = #tpu.dot_dimension_numbers<[1], [0], [0], [1], [0, 0, 1, 1], [], []>} : vector<8x96xf32>, vector<96x9xf32>, vector<8x9xf32> -> vector<8x9xf32>
    %c0_26 = arith.constant 0 : index
    %c0_27 = arith.constant 0 : index
    %28 = vector.load %arg12[%c0_26, %c0_27] : memref<1x9xf32, #tpu.memory_space<vmem>>, vector<1x9xf32>
    %29 = vector.broadcast %28 : vector<1x9xf32> to vector<8x9xf32>
    %30 = arith.addf %27, %29 : vector<8x9xf32>
    %31 = vector.extract_strided_slice %30 {offsets = [0, 0], sizes = [8, 3], strides = [1, 1]} : vector<8x9xf32> to vector<8x3xf32>
    %32 = vector.extract_strided_slice %30 {offsets = [0, 3], sizes = [8, 3], strides = [1, 1]} : vector<8x9xf32> to vector<8x3xf32>
    %33 = vector.extract_strided_slice %30 {offsets = [0, 6], sizes = [8, 3], strides = [1, 1]} : vector<8x9xf32> to vector<8x3xf32>
    %34 = math.exp %32 : vector<8x3xf32>
    %cst_28 = arith.constant dense<0xFF800000> : vector<8xf32>
    %35 = vector.multi_reduction <maximumf>, %33, %cst_28 [1] : vector<8x3xf32> to vector<8xf32>
    %36 = vector.shape_cast %35 : vector<8xf32> to vector<8x1xf32>
    %37 = vector.broadcast %36 : vector<8x1xf32> to vector<8x3xf32>
    %38 = arith.subf %33, %37 : vector<8x3xf32>
    %39 = math.exp %38 : vector<8x3xf32>
    %cst_29 = arith.constant dense<0.000000e+00> : vector<8xf32>
    %40 = vector.multi_reduction <add>, %39, %cst_29 [1] : vector<8x3xf32> to vector<8xf32>
    %41 = vector.shape_cast %40 : vector<8xf32> to vector<8x1xf32>
    %42 = tpu.reciprocal %41 : vector<8x1xf32> -> vector<8x1xf32>
    %43 = vector.broadcast %42 : vector<8x1xf32> to vector<8x3xf32>
    %44 = arith.mulf %39, %43 : vector<8x3xf32>
    %c0_30 = arith.constant 0 : index
    %c0_31 = arith.constant 0 : index
    %45 = vector.load %arg4[%c0_30, %c0_31] : memref<8x1xf32, #tpu.memory_space<vmem>>, vector<8x1xf32>
    %cst_32 = arith.constant 1.000000e+00 : f32
    %46 = vector.broadcast %cst_32 : f32 to vector<8x1xf32>
    %47 = arith.addf %45, %46 : vector<8x1xf32>
    %48 = math.log %47 : vector<8x1xf32>
    %cst_33 = arith.constant 6.28318548 : f32
    %49 = vector.broadcast %cst_33 : f32 to vector<8x3xf32>
    %50 = arith.mulf %34, %49 : vector<8x3xf32>
    %51 = math.rsqrt %50 : vector<8x3xf32>
    %52 = arith.mulf %31, %31 : vector<8x3xf32>
    %53 = arith.mulf %48, %48 : vector<8x1xf32>
    %54 = vector.broadcast %53 : vector<8x1xf32> to vector<8x3xf32>
    %55 = arith.addf %52, %54 : vector<8x3xf32>
    %cst_34 = arith.constant 2.000000e+00 : f32
    %56 = vector.broadcast %cst_34 : f32 to vector<8x1xf32>
    %57 = arith.mulf %56, %48 : vector<8x1xf32>
    %58 = vector.broadcast %57 : vector<8x1xf32> to vector<8x3xf32>
    %59 = arith.mulf %58, %31 : vector<8x3xf32>
    %60 = arith.subf %55, %59 : vector<8x3xf32>
    %cst_35 = arith.constant 0.000000e+00 : f32
    %61 = vector.broadcast %cst_35 : f32 to vector<8x3xf32>
    %62 = arith.subf %61, %60 : vector<8x3xf32>
    %cst_36 = arith.constant 2.000000e+00 : f32
    %63 = vector.broadcast %cst_36 : f32 to vector<8x3xf32>
    %64 = arith.mulf %63, %34 : vector<8x3xf32>
    %65 = arith.divf %62, %64 : vector<8x3xf32>
    %66 = math.exp %65 : vector<8x3xf32>
    %67 = arith.mulf %66, %51 : vector<8x3xf32>
    %68 = arith.mulf %67, %44 : vector<8x3xf32>
    %cst_37 = arith.constant dense<0.000000e+00> : vector<8xf32>
    %69 = vector.multi_reduction <add>, %68, %cst_37 [1] : vector<8x3xf32> to vector<8xf32>
    %70 = vector.shape_cast %69 : vector<8xf32> to vector<8x1xf32>
    %71 = math.log %70 : vector<8x1xf32>
    %cst_38 = arith.constant 0.000000e+00 : f32
    %72 = vector.broadcast %cst_38 : f32 to vector<8x1xf32>
    %73 = arith.subf %72, %71 : vector<8x1xf32>
    %74 = arith.mulf %31, %44 : vector<8x3xf32>
    %cst_39 = arith.constant dense<0.000000e+00> : vector<8xf32>
    %75 = vector.multi_reduction <add>, %74, %cst_39 [1] : vector<8x3xf32> to vector<8xf32>
    %76 = vector.shape_cast %75 : vector<8xf32> to vector<8x1xf32>
    %c8_i32 = arith.constant 8 : i32
    %77 = arith.muli %arg0, %c8_i32 : i32
    %78 = tpu.iota {dimensions = array<i32: 0>} : vector<8x1xi32>
    %79 = vector.broadcast %77 : i32 to vector<8x1xi32>
    %80 = arith.addi %79, %78 : vector<8x1xi32>
    %c8_i32_40 = arith.constant 8 : i32
    %81 = vector.broadcast %c8_i32_40 : i32 to vector<8x1xi32>
    %82 = arith.cmpi slt, %80, %81 : vector<8x1xi32>
    %83 = arith.subf %76, %48 : vector<8x1xf32>
    %cst_41 = arith.constant 0.000000e+00 : f32
    %84 = vector.broadcast %cst_41 : f32 to vector<8x1xf32>
    %85 = arith.select %82, %83, %84 : vector<8x1xi1>, vector<8x1xf32>
    %cst_42 = arith.constant 0.000000e+00 : f32
    %86 = vector.broadcast %cst_42 : f32 to vector<8x1xf32>
    %87 = arith.select %82, %73, %86 : vector<8x1xi1>, vector<8x1xf32>
    %c0_43 = arith.constant 0 : index
    %c0_44 = arith.constant 0 : index
    %88 = vector.load %arg17[%c0_43, %c0_44] : memref<1x1xf32, #tpu.memory_space<vmem>>, vector<1x1xf32>
    %89 = arith.mulf %85, %85 : vector<8x1xf32>
    %90 = vector.shape_cast %89 : vector<8x1xf32> to vector<1x8x1xf32>
    %cst_45 = arith.constant dense<0.000000e+00> : vector<1xf32>
    %91 = vector.multi_reduction <add>, %90, %cst_45 [1, 2] : vector<1x8x1xf32> to vector<1xf32>
    %92 = vector.shape_cast %91 : vector<1xf32> to vector<1x1x1xf32>
    %93 = vector.extract %92[0, 0, 0] : f32 from vector<1x1x1xf32>
    %94 = vector.broadcast %93 : f32 to vector<1x1xf32>
    %95 = arith.addf %88, %94 : vector<1x1xf32>
    %c0_46 = arith.constant 0 : index
    %c0_47 = arith.constant 0 : index
    %96 = vector.load %arg17[%c0_46, %c0_47] : memref<1x1xf32, #tpu.memory_space<vmem>>, vector<1x1xf32>
    tpu.vector_store %arg17[%c0_46, %c0_47], %95 {strides = array<i32>} : memref<1x1xf32, #tpu.memory_space<vmem>>, vector<1x1xf32>,
    %c0_48 = arith.constant 0 : index
    %c0_49 = arith.constant 0 : index
    %97 = vector.load %arg18[%c0_48, %c0_49] : memref<1x1xf32, #tpu.memory_space<vmem>>, vector<1x1xf32>
    %98 = vector.shape_cast %87 : vector<8x1xf32> to vector<1x8x1xf32>
    %cst_50 = arith.constant dense<0.000000e+00> : vector<1xf32>
    %99 = vector.multi_reduction <add>, %98, %cst_50 [1, 2] : vector<1x8x1xf32> to vector<1xf32>
    %100 = vector.shape_cast %99 : vector<1xf32> to vector<1x1x1xf32>
    %101 = vector.extract %100[0, 0, 0] : f32 from vector<1x1x1xf32>
    %102 = vector.broadcast %101 : f32 to vector<1x1xf32>
    %103 = arith.addf %97, %102 : vector<1x1xf32>
    %c0_51 = arith.constant 0 : index
    %c0_52 = arith.constant 0 : index
    %104 = vector.load %arg18[%c0_51, %c0_52] : memref<1x1xf32, #tpu.memory_space<vmem>>, vector<1x1xf32>
    tpu.vector_store %arg18[%c0_51, %c0_52], %103 {strides = array<i32>} : memref<1x1xf32, #tpu.memory_space<vmem>>, vector<1x1xf32>,
    %105 = vector.shape_cast %76 : vector<8x1xf32> to vector<1x8xf32>
    %c0_53 = arith.constant 0 : index
    %c0_54 = arith.constant 0 : index
    %106 = vector.load %arg15[%c0_53, %c0_54] : memref<1x8xf32, #tpu.memory_space<vmem>>, vector<1x8xf32>
    tpu.vector_store %arg15[%c0_53, %c0_54], %105 {strides = array<i32>} : memref<1x8xf32, #tpu.memory_space<vmem>>, vector<1x8xf32>,
    %107 = vector.shape_cast %48 : vector<8x1xf32> to vector<1x8xf32>
    %c0_55 = arith.constant 0 : index
    %c0_56 = arith.constant 0 : index
    %108 = vector.load %arg16[%c0_55, %c0_56] : memref<1x8xf32, #tpu.memory_space<vmem>>, vector<1x8xf32>
    tpu.vector_store %arg16[%c0_55, %c0_56], %107 {strides = array<i32>} : memref<1x8xf32, #tpu.memory_space<vmem>>, vector<1x8xf32>,
    %c0_i32_57 = arith.constant 0 : i32
    %109 = arith.cmpi eq, %arg0, %c0_i32_57 : i32
    %110 = arith.extui %109 : i1 to i32
    %c0_i32_58 = arith.constant 0 : i32
    %111 = arith.cmpi ne, %110, %c0_i32_58 : i32
    scf.if %111 {
      %c0_59 = arith.constant 0 : index
      %c0_60 = arith.constant 0 : index
      %112 = vector.load %arg17[%c0_59, %c0_60] : memref<1x1xf32, #tpu.memory_space<vmem>>, vector<1x1xf32>
      %113 = math.sqrt %112 : vector<1x1xf32>
      %c0_61 = arith.constant 0 : index
      %c0_62 = arith.constant 0 : index
      %114 = vector.load %arg13[%c0_61, %c0_62] : memref<1x1xf32, #tpu.memory_space<vmem>>, vector<1x1xf32>
      tpu.vector_store %arg13[%c0_61, %c0_62], %113 {strides = array<i32>} : memref<1x1xf32, #tpu.memory_space<vmem>>, vector<1x1xf32>,
      %c0_63 = arith.constant 0 : index
      %c0_64 = arith.constant 0 : index
      %115 = vector.load %arg18[%c0_63, %c0_64] : memref<1x1xf32, #tpu.memory_space<vmem>>, vector<1x1xf32>
      %c0_65 = arith.constant 0 : index
      %c0_66 = arith.constant 0 : index
      %116 = vector.load %arg14[%c0_65, %c0_66] : memref<1x1xf32, #tpu.memory_space<vmem>>, vector<1x1xf32>
      tpu.vector_store %arg14[%c0_65, %c0_66], %115 {strides = array<i32>} : memref<1x1xf32, #tpu.memory_space<vmem>>, vector<1x1xf32>,
    } else {
    }
    return
  }
  func.func @transform_0(%arg0: i32) -> (i32, i32) {
    %c0_i32 = arith.constant 0 : i32
    %c0_i32_0 = arith.constant 0 : i32
    return %arg0, %c0_i32 : i32, i32
  }
  func.func @transform_1(%arg0: i32) -> (i32, i32) {
    %c0_i32 = arith.constant 0 : i32
    %c0_i32_0 = arith.constant 0 : i32
    return %arg0, %c0_i32 : i32, i32
  }
  func.func @transform_2(%arg0: i32) -> (i32, i32) {
    %c0_i32 = arith.constant 0 : i32
    %c0_i32_0 = arith.constant 0 : i32
    return %arg0, %c0_i32 : i32, i32
  }
  func.func @transform_3(%arg0: i32) -> (i32, i32) {
    %c0_i32 = arith.constant 0 : i32
    %c0_i32_0 = arith.constant 0 : i32
    return %arg0, %c0_i32 : i32, i32
  }
  func.func @transform_4(%arg0: i32) -> (i32, i32) {
    %c0_i32 = arith.constant 0 : i32
    %c0_i32_0 = arith.constant 0 : i32
    %c0_i32_1 = arith.constant 0 : i32
    return %c0_i32, %c0_i32_0 : i32, i32
  }
  func.func @transform_5(%arg0: i32) -> (i32, i32) {
    %c0_i32 = arith.constant 0 : i32
    %c0_i32_0 = arith.constant 0 : i32
    %c0_i32_1 = arith.constant 0 : i32
    return %c0_i32, %c0_i32_0 : i32, i32
  }
  func.func @transform_6(%arg0: i32) -> (i32, i32) {
    %c0_i32 = arith.constant 0 : i32
    %c0_i32_0 = arith.constant 0 : i32
    %c0_i32_1 = arith.constant 0 : i32
    return %c0_i32, %c0_i32_0 : i32, i32
  }
  func.func @transform_7(%arg0: i32) -> (i32, i32) {
    %c0_i32 = arith.constant 0 : i32
    %c0_i32_0 = arith.constant 0 : i32
    %c0_i32_1 = arith.constant 0 : i32
    return %c0_i32, %c0_i32_0 : i32, i32
  }
  func.func @transform_8(%arg0: i32) -> (i32, i32) {
    %c0_i32 = arith.constant 0 : i32
    %c0_i32_0 = arith.constant 0 : i32
    %c0_i32_1 = arith.constant 0 : i32
    return %c0_i32, %c0_i32_0 : i32, i32
  }
  func.func @transform_9(%arg0: i32) -> (i32, i32) {
    %c0_i32 = arith.constant 0 : i32
    %c0_i32_0 = arith.constant 0 : i32
    %c0_i32_1 = arith.constant 0 : i32
    return %c0_i32, %c0_i32_0 : i32, i32
  }
  func.func @transform_10(%arg0: i32) -> (i32, i32) {
    %c0_i32 = arith.constant 0 : i32
    %c0_i32_0 = arith.constant 0 : i32
    %c0_i32_1 = arith.constant 0 : i32
    return %c0_i32, %c0_i32_0 : i32, i32
  }
  func.func @transform_11(%arg0: i32) -> (i32, i32) {
    %c0_i32 = arith.constant 0 : i32
    %c0_i32_0 = arith.constant 0 : i32
    %c0_i32_1 = arith.constant 0 : i32
    return %c0_i32, %c0_i32_0 : i32, i32
  }
  func.func @transform_12(%arg0: i32) -> (i32, i32) {
    %c0_i32 = arith.constant 0 : i32
    %c0_i32_0 = arith.constant 0 : i32
    %c0_i32_1 = arith.constant 0 : i32
    return %c0_i32, %c0_i32_0 : i32, i32
  }
  func.func @transform_13(%arg0: i32) -> (i32, i32) {
    %c0_i32 = arith.constant 0 : i32
    %c0_i32_0 = arith.constant 0 : i32
    %c0_i32_1 = arith.constant 0 : i32
    return %c0_i32, %c0_i32_0 : i32, i32
  }
  func.func @transform_14(%arg0: i32) -> (i32, i32) {
    %c0_i32 = arith.constant 0 : i32
    %c0_i32_0 = arith.constant 0 : i32
    return %c0_i32, %arg0 : i32, i32
  }
  func.func @transform_15(%arg0: i32) -> (i32, i32) {
    %c0_i32 = arith.constant 0 : i32
    %c0_i32_0 = arith.constant 0 : i32
    return %c0_i32, %arg0 : i32, i32
  }
}

</mosaic_0001>

<llo_original>
// kernel: tpu_custom_call.1
$region0: #{tpu_custom_call.1}
  #allocation0 [shape = 'u32[]', space=smem, size = 0x4, offset = 0x4, fixed_abs, tag = 'smem constant byte address 0x4 - core index']
  #allocation1 [shape = 'u32[72,128]{1,0:T(1,128)}', space=vmem, size = 0x9000, scoped, tag = 'internal scratch']
  #allocation2 [shape = 'f32[1,1]{1,0:T(1,128)}', space=vmem, size = 0x200, scoped, tag = 'scratch operand']
  #allocation3 [shape = 'f32[1,1]{1,0:T(1,128)}', space=vmem, size = 0x200, scoped, tag = 'scratch operand']
  %s0 = inlined_call_operand.vmem [shape: f32[8,8], index: 0, kind: input, shape index: {}]
  %s1 = inlined_call_operand.vmem [shape: f32[8,8], index: 1, kind: input, shape index: {}]
  %s2 = inlined_call_operand.vmem [shape: f32[8,16], index: 2, kind: input, shape index: {}]
  %s3 = inlined_call_operand.vmem [shape: f32[8,1], index: 3, kind: input, shape index: {}]
  %s4 = inlined_call_operand.vmem [shape: f32[8,32], index: 4, kind: input, shape index: {}]
  %s5 = inlined_call_operand.vmem [shape: f32[8,32], index: 5, kind: input, shape index: {}]
  %s6 = inlined_call_operand.vmem [shape: f32[16,32], index: 6, kind: input, shape index: {}]
  %s7 = inlined_call_operand.vmem [shape: f32[1,32], index: 7, kind: input, shape index: {}]
  %s8 = inlined_call_operand.vmem [shape: f32[32,96], index: 8, kind: input, shape index: {}]
  %s9 = inlined_call_operand.vmem [shape: f32[1,96], index: 9, kind: input, shape index: {}]
  %s10 = inlined_call_operand.vmem [shape: f32[96,9], index: 10, kind: input, shape index: {}]
  %s11 = inlined_call_operand.vmem [shape: f32[1,9], index: 11, kind: input, shape index: {}]
  %s12 = inlined_call_operand.hbm [shape: f32[1,1], index: 12, kind: output, shape index: {0}]
  %s13 = inlined_call_operand.hbm [shape: f32[1,1], index: 13, kind: output, shape index: {1}]
  %s14 = inlined_call_operand.hbm [shape: f32[1,8], index: 14, kind: output, shape index: {2}]
  %s15 = inlined_call_operand.hbm [shape: f32[1,8], index: 15, kind: output, shape index: {3}]
  %16 = xla_tuple %s12, %s13, %s14, %s15
  %s17 = sld [smem:[#allocation0]]
  $region90: #{tpu_custom_call.1} parent=0
    _
  %s19 = ssub.s32 1, %s17
  %s20 = scalar_select 0, %s19, %s17
  $region1: #{tpu_custom_call.1} parent=0
    #allocation4 [shape = 'u8[512]{0}', space=vmem, size = 0x400, scoped, tag = 'output window, operand 0, single buffered']
    #allocation5 [shape = 's32[1]{0}', space=sflag, size = 0x4, scoped, tag = 'scoped memory for tpu_custom_call.1']
    #allocation6 [shape = 'u8[512]{0}', space=vmem, size = 0x400, scoped, tag = 'output window, operand 1, single buffered']
    #allocation7 [shape = 's32[1]{0}', space=sflag, size = 0x4, scoped, tag = 'scoped memory for tpu_custom_call.1']
    #allocation8 [shape = 'u8[512]{0}', space=vmem, size = 0x400, scoped, tag = 'output window, operand 2, single buffered']
    #allocation9 [shape = 'u8[512]{0}', space=vmem, size = 0x400, scoped, tag = 'output window, operand 3, single buffered']
    #allocation10 [shape = 's32[1]{0}', space=sflag, size = 0x4, scoped, tag = 'scoped memory for tpu_custom_call.1']
    %21 = vsyncpa [#allocation5], 0
    %22 = vsyncpa [#allocation7], 0
    %23 = vsyncpa [#allocation10], 0
    // Predicated region
    $region2: #{tpu_custom_call.1} parent=1 // pred_check
      _
    $region3: #{tpu_custom_call.1} parent=1 // pred_check_branch
      %25 = sbr.rel (0) target = $region5
    $region4: #{tpu_custom_call.1} parent=1 // pred_region
      _
    $region5: #{tpu_custom_call.1} parent=1 // pred_fallthru
      _
    // Predicated region
    $region6: #{tpu_custom_call.1} parent=1 // pred_check
      _
    $region7: #{tpu_custom_call.1} parent=1 // pred_check_branch
      %27 = sbr.rel (0) target = $region9
    $region8: #{tpu_custom_call.1} parent=1 // pred_region
      _
    $region9: #{tpu_custom_call.1} parent=1 // pred_fallthru
      _
    // Predicated region
    $region10: #{tpu_custom_call.1} parent=1 // pred_check
      _
    $region11: #{tpu_custom_call.1} parent=1 // pred_check_branch
      %29 = sbr.rel (0) target = $region13
    $region12: #{tpu_custom_call.1} parent=1 // pred_region
      _
    $region13: #{tpu_custom_call.1} parent=1 // pred_fallthru
      _
    // Predicated region
    $region14: #{tpu_custom_call.1} parent=1 // pred_check
      _
    $region15: #{tpu_custom_call.1} parent=1 // pred_check_branch
      %31 = sbr.rel (0) target = $region17
    $region16: #{tpu_custom_call.1} parent=1 // pred_region
      _
    $region17: #{tpu_custom_call.1} parent=1 // pred_fallthru
      _
    // Predicated region
    $region18: #{tpu_custom_call.1} parent=1 // pred_check
      _
    $region19: #{tpu_custom_call.1} parent=1 // pred_check_branch
      %33 = sbr.rel (0) target = $region21
    $region20: #{tpu_custom_call.1} parent=1 // pred_region
      _
    $region21: #{tpu_custom_call.1} parent=1 // pred_fallthru
      _
    // Predicated region
    $region22: #{tpu_custom_call.1} parent=1 // pred_check
      _
    $region23: #{tpu_custom_call.1} parent=1 // pred_check_branch
      %35 = sbr.rel (0) target = $region25
    $region24: #{tpu_custom_call.1} parent=1 // pred_region
      _
    $region25: #{tpu_custom_call.1} parent=1 // pred_fallthru
      _
    // Predicated region
    $region26: #{tpu_custom_call.1} parent=1 // pred_check
      _
    $region27: #{tpu_custom_call.1} parent=1 // pred_check_branch
      %37 = sbr.rel (0) target = $region29
    $region28: #{tpu_custom_call.1} parent=1 // pred_region
      _
    $region29: #{tpu_custom_call.1} parent=1 // pred_fallthru
      _
    // Predicated region
    $region30: #{tpu_custom_call.1} parent=1 // pred_check
      _
    $region31: #{tpu_custom_call.1} parent=1 // pred_check_branch
      %39 = sbr.rel (0) target = $region33
    $region32: #{tpu_custom_call.1} parent=1 // pred_region
      _
    $region33: #{tpu_custom_call.1} parent=1 // pred_fallthru
      _
    // Predicated region
    $region34: #{tpu_custom_call.1} parent=1 // pred_check
      _
    $region35: #{tpu_custom_call.1} parent=1 // pred_check_branch
      %41 = sbr.rel (0) target = $region37
    $region36: #{tpu_custom_call.1} parent=1 // pred_region
      _
    $region37: #{tpu_custom_call.1} parent=1 // pred_fallthru
      _
    // Predicated region
    $region38: #{tpu_custom_call.1} parent=1 // pred_check
      _
    $region39: #{tpu_custom_call.1} parent=1 // pred_check_branch
      %43 = sbr.rel (0) target = $region41
    $region40: #{tpu_custom_call.1} parent=1 // pred_region
      _
    $region41: #{tpu_custom_call.1} parent=1 // pred_fallthru
      _
    // Predicated region
    $region42: #{tpu_custom_call.1} parent=1 // pred_check
      _
    $region43: #{tpu_custom_call.1} parent=1 // pred_check_branch
      %45 = sbr.rel (0) target = $region45
    $region44: #{tpu_custom_call.1} parent=1 // pred_region
      _
    $region45: #{tpu_custom_call.1} parent=1 // pred_fallthru
      _
    // Predicated region
    $region46: #{tpu_custom_call.1} parent=1 // pred_check
      _
    $region47: #{tpu_custom_call.1} parent=1 // pred_check_branch
      %47 = sbr.rel (0) target = $region49
    $region48: #{tpu_custom_call.1} parent=1 // pred_region
      _
    $region49: #{tpu_custom_call.1} parent=1 // pred_fallthru
      _
    %p48 = scmp.eq.s32.totalorder 0, 0
    // Predicated region
    $region50: #{tpu_custom_call.1} parent=1 // pred_check
      %p49 = pneg %p48
    $region51: #{tpu_custom_call.1} parent=1 // pred_check_branch
      %51 = sbr.rel (%p49) target = $region53
    $region52: #{tpu_custom_call.1} parent=1 // pred_region
      %vm52 = vcmask 0
      %53 = vst.msk [vmem:[#allocation2] sm:$0x1] %vm52, 0.0
      %54 = vst.msk [vmem:[#allocation3] sm:$0x1] %vm52, 0.0
    $region53: #{tpu_custom_call.1} parent=1 // pred_fallthru
      _
    %v55 = vld [vmem:[%s0] sm:$0xff]
    %v56 = vld [vmem:[%s4] sm:$0xff]
    %v57 = vld [vmem:[%s1] sm:$0xff]
    %v58 = vld [vmem:[%s5] sm:$0xff]
    %vm59 = vcmask 64512
    %v61 = vsel %vm59, %v57, 0
    %63 = vmatpush.msra.mxu0 0.0
    %64 = vmatpush.msra.mxu0 0.0
    %65 = vmatpush.msra.mxu0 0.0
    %66 = vmatpush.msra.mxu0 0.0
    %67 = vmatpush.msra.mxu0 0.0
    %68 = vmatpush.msra.mxu0 0.0
    %69 = vmatpush.msra.mxu0 0.0
    %70 = vmatpush.msra.mxu0 0.0
    %71 = vmatpush.msra.mxu0 0.0
    %72 = vmatpush.msra.mxu0 0.0
    %73 = vmatpush.msra.mxu0 0.0
    %74 = vmatpush.msra.mxu0 0.0
    %75 = vmatpush.msra.mxu0 0.0
    %76 = vmatpush.msra.mxu0 0.0
    %77 = vmatpush.msra.mxu0 0.0
    %78 = vmatpush.msra.mxu0 %v58
    %79 = vmatmul.f32.gmra.mxu0 %v61
    %v80 = vpop.f32.mrf.mxu0
    %v81 = vadd.f32 0.0, %v80
    %82 = vdwg.mxu0
    %v84 = vsel %vm59, %v55, 0
    %86 = vmatpush.msra.mxu0 0.0
    %87 = vmatpush.msra.mxu0 0.0
    %88 = vmatpush.msra.mxu0 0.0
    %89 = vmatpush.msra.mxu0 0.0
    %90 = vmatpush.msra.mxu0 0.0
    %91 = vmatpush.msra.mxu0 0.0
    %92 = vmatpush.msra.mxu0 0.0
    %93 = vmatpush.msra.mxu0 0.0
    %94 = vmatpush.msra.mxu0 0.0
    %95 = vmatpush.msra.mxu0 0.0
    %96 = vmatpush.msra.mxu0 0.0
    %97 = vmatpush.msra.mxu0 0.0
    %98 = vmatpush.msra.mxu0 0.0
    %99 = vmatpush.msra.mxu0 0.0
    %100 = vmatpush.msra.mxu0 0.0
    %101 = vmatpush.msra.mxu0 %v56
    %102 = vmatmul.f32.gmra.mxu0 %v84
    %v103 = vpop.f32.mrf.mxu0
    %v104 = vadd.f32 %v81, %v103
    %105 = vdwg.mxu0
    %v106 = vld [vmem:[%s2] sm:$0xff]
    %v107 = vld [vmem:[%s6] sm:$0xff]
    %v108 = vld [vmem:[%s6 + $0x8] sm:$0xff]
    %vm109 = vcmask 130048
    %v111 = vsel %vm109, %v106, 0
    %113 = vmatpush.msra.mxu0 0.0
    %114 = vmatpush.msra.mxu0 0.0
    %115 = vmatpush.msra.mxu0 0.0
    %116 = vmatpush.msra.mxu0 0.0
    %117 = vmatpush.msra.mxu0 0.0
    %118 = vmatpush.msra.mxu0 0.0
    %119 = vmatpush.msra.mxu0 0.0
    %120 = vmatpush.msra.mxu0 0.0
    %121 = vmatpush.msra.mxu0 0.0
    %122 = vmatpush.msra.mxu0 0.0
    %123 = vmatpush.msra.mxu0 0.0
    %124 = vmatpush.msra.mxu0 0.0
    %125 = vmatpush.msra.mxu0 0.0
    %126 = vmatpush.msra.mxu0 0.0
    %127 = vmatpush.msra.mxu0 %v108
    %128 = vmatpush.msra.mxu0 %v107
    %129 = vmatmul.f32.gmra.mxu0 %v111
    %v130 = vpop.f32.mrf.mxu0
    %v131 = vadd.f32 0.0, %v130
    %132 = vdwg.mxu0
    %v133 = vadd.f32 %v104, %v131
    %v134 = vld [vmem:[%s7] sm:$0x1]
    %v136 = vperm.slane %v134, 0
    %v138 = vadd.f32 %v133, %v136
    %v139 = vmax.f32 %v138, 0.0
    %v140 = vld [vmem:[%s8] sm:$0xff]
    %v141 = vld [vmem:[%s8 + $0x8] sm:$0xff]
    %v142 = vld [vmem:[%s8 + $0x10] sm:$0xff]
    %v143 = vld [vmem:[%s8 + $0x18] sm:$0xff]
    %v144 = vld [vmem:[%s9] sm:$0x1]
    %v146 = vperm.slane %v144, 0
    %vm148 = vcmask 261120
    %v150 = vsel %vm148, %v139, 0
    %152 = vmatpush.msra.mxu0 0.0
    %153 = vmatpush.msra.mxu0 0.0
    %154 = vmatpush.msra.mxu0 0.0
    %155 = vmatpush.msra.mxu0 0.0
    %156 = vmatpush.msra.mxu0 0.0
    %157 = vmatpush.msra.mxu0 0.0
    %158 = vmatpush.msra.mxu0 0.0
    %159 = vmatpush.msra.mxu0 0.0
    %160 = vmatpush.msra.mxu0 0.0
    %161 = vmatpush.msra.mxu0 0.0
    %162 = vmatpush.msra.mxu0 0.0
    %163 = vmatpush.msra.mxu0 0.0
    %164 = vmatpush.msra.mxu0 %v143
    %165 = vmatpush.msra.mxu0 %v142
    %166 = vmatpush.msra.mxu0 %v141
    %167 = vmatpush.msra.mxu0 %v140
    %168 = vmatmul.f32.gmra.mxu0 %v150
    %v169 = vpop.f32.mrf.mxu0
    %v170 = vadd.f32 %v146, %v169
    %171 = vdwg.mxu0
    %v172 = vmax.f32 %v170, 0.0
    %v173 = vld [vmem:[%s10] sm:$0xff]
    %v174 = vld [vmem:[%s10 + $0x8] sm:$0xff]
    %v175 = vld [vmem:[%s10 + $0x10] sm:$0xff]
    %v176 = vld [vmem:[%s10 + $0x18] sm:$0xff]
    %v177 = vld [vmem:[%s10 + $0x20] sm:$0xff]
    %v178 = vld [vmem:[%s10 + $0x28] sm:$0xff]
    %v179 = vld [vmem:[%s10 + $0x30] sm:$0xff]
    %v180 = vld [vmem:[%s10 + $0x38] sm:$0xff]
    %v181 = vld [vmem:[%s10 + $0x40] sm:$0xff]
    %v182 = vld [vmem:[%s10 + $0x48] sm:$0xff]
    %v183 = vld [vmem:[%s10 + $0x50] sm:$0xff]
    %v184 = vld [vmem:[%s10 + $0x58] sm:$0xff]
    %v185 = vld [vmem:[%s11] sm:$0x1]
    %v187 = vperm.slane %v185, 0
    %vm189 = vcmask 785408
    %v191 = vsel %vm189, %v172, 0
    %193 = vmatpush.msra.mxu0 0.0
    %194 = vmatpush.msra.mxu0 0.0
    %195 = vmatpush.msra.mxu0 0.0
    %196 = vmatpush.msra.mxu0 0.0
    %197 = vmatpush.msra.mxu0 %v184
    %198 = vmatpush.msra.mxu0 %v183
    %199 = vmatpush.msra.mxu0 %v182
    %200 = vmatpush.msra.mxu0 %v181
    %201 = vmatpush.msra.mxu0 %v180
    %202 = vmatpush.msra.mxu0 %v179
    %203 = vmatpush.msra.mxu0 %v178
    %204 = vmatpush.msra.mxu0 %v177
    %205 = vmatpush.msra.mxu0 %v176
    %206 = vmatpush.msra.mxu0 %v175
    %207 = vmatpush.msra.mxu0 %v174
    %208 = vmatpush.msra.mxu0 %v173
    %209 = vmatmul.f32.gmra.mxu0 %v191
    %v210 = vpop.f32.mrf.mxu0
    %v211 = vadd.f32 %v187, %v210
    %212 = vdwg.mxu0
    %v213 = vmul.f32 %v211, 1.442695
    %v214 = vpow.pop %v213
    %vm215 = vcmask 72752
    %v216 = vsel %vm215, %v211, -inf
    %217 = vmax.xlane.f32.xlu0 %v216
    %v218 = vpop.xlane.xlu0 %217
    %v219 = vsub.f32 %v211, %v218
    %v220 = vmul.f32 %v219, 1.442695
    %v221 = vpow.pop %v220
    %223 = vrot.lane.b32.xlu0 %v221, 122
    %v224 = vpop.permute.xlu0 %223
    %vm226 = vcmask 23552
    %v227 = vsel %vm226, %v224, 0.0
    %228 = vadd.xlane.f32.xlu0 %v227
    %v229 = vpop.xlane.xlu0 %228
    %v230 = vrcp.pop %v229
    %v231 = vmul.f32 %v229, %v230
    %v232 = vsub.f32 1.0, %v231
    %v233 = vmul.f32 %v230, %v232
    %v234 = vadd.f32 %v230, %v233
    %vm235 = vweird.f32 %v229
    %vm236 = vweird.f32 %v230
    %vm237 = vmor %vm235, %vm236
    %v238 = vsel %vm237, %v230, %v234
    %v239 = vand.u32 2147483647, %v229
    %vm240 = vcmp.eq.f32.partialorder %v239, 8.507059e+37
    %v241 = vand.u32 %v229, 2147483648
    %v242 = vor.u32 1.1754944e-38, %v241
    %v243 = vsel %vm240, %v242, %v238
    %v244 = vmul.f32 %v221, %v243
    %v245 = vld [vmem:[%s3] sm:$0xff]
    %v246 = vadd.f32 %v245, 1.0
    %v247 = vlog2.pop %v246
    %v248 = vmul.f32 %v247, 0.6931472
    %v249 = vmul.f32 %v214, 6.2831855
    %v250 = vrsqrt.pop %v249
    %v251 = vmul.f32 %v250, %v249
    %v252 = vmul.f32 %v251, %v250
    %v253 = vmul.f32 0.5, %v252
    %v254 = vsub.f32 1.5, %v253
    %v255 = vmul.f32 %v250, %v254
    %vm256 = vweird.f32 %v249
    %vm257 = vweird.f32 %v250
    %vm258 = vmor %vm256, %vm257
    %v259 = vsel %vm258, %v250, %v255
    %v260 = vmul.f32 %v211, %v211
    %v261 = vmul.f32 %v248, %v248
    %263 = vset.pattern.permute.xlu0 0
    %264 = vperm.xlu0 %263, %v261
    %v265 = vpop.permute.xlu0 %264
    %v267 = vadd.f32 %v260, %v265
    %v268 = vmul.f32 %v248, 2.0
    %270 = vset.pattern.permute.xlu0 0
    %271 = vperm.xlu0 %270, %v268
    %v272 = vpop.permute.xlu0 %271
    %v274 = vmul.f32 %v272, %v211
    %v275 = vsub.f32 %v267, %v274
    %v276 = vsub.f32 0.0, %v275
    %v277 = vmul.f32 %v214, 2.0
    %279 = vrot.lane.b32.xlu0 %v277, 125
    %v280 = vpop.permute.xlu0 %279
    %v282 = vrcp.pop %v280
    %v283 = vmul.f32 %v280, %v282
    %v284 = vsub.f32 1.0, %v283
    %v285 = vmul.f32 %v282, %v284
    %v286 = vadd.f32 %v282, %v285
    %vm287 = vweird.f32 %v280
    %vm288 = vweird.f32 %v282
    %vm289 = vmor %vm287, %vm288
    %v290 = vsel %vm289, %v282, %v286
    %v291 = vand.u32 2147483647, %v280
    %vm292 = vcmp.eq.f32.partialorder %v291, 8.507059e+37
    %v293 = vand.u32 %v280, 2147483648
    %v294 = vor.u32 1.1754944e-38, %v293
    %v295 = vsel %vm292, %v294, %v290
    %v296 = vmul.f32 %v276, %v295
    %v297 = vmul.f32 %v296, 1.442695
    %v298 = vpow.pop %v297
    %300 = vrot.lane.b32.xlu0 %v259, 125
    %v301 = vpop.permute.xlu0 %300
    %v303 = vmul.f32 %v298, %v301
    %305 = vrot.lane.b32.xlu0 %v244, 122
    %v306 = vpop.permute.xlu0 %305
    %v308 = vmul.f32 %v303, %v306
    %v309 = vsel %vm226, %v308, 0.0
    %310 = vadd.xlane.f32.xlu0 %v309
    %v311 = vpop.xlane.xlu0 %310
    %v312 = vlog2.pop %v311
    %v313 = vmul.f32 %v312, 0.6931472
    %v314 = vsub.f32 0.0, %v313
    %v315 = vmul.f32 %v211, %v306
    %v316 = vsel %vm226, %v315, 0.0
    %317 = vadd.xlane.f32.xlu0 %v316
    %v318 = vpop.xlane.xlu0 %317
    %s319 = smul.u32 0, 8
    %v320 = vlaneseq
    %v321 = vshrl.u32 %v320, 7
    %v322 = vstv %s319
    %v323 = vadd.s32 %v322, %v321
    %vm324 = vcmp.lt.s32.totalorder %v323, 8
    %v325 = vsub.f32 %v318, %v248
    %v326 = vsel %vm324, %v325, 0.0
    %v327 = vsel %vm324, %v314, 0.0
    %v328 = vld [vmem:[#allocation2] sm:$0x1]
    %v329 = vmul.f32 %v326, %v326
    %vm330 = vcmask 7168
    %v331 = vsel %vm330, %v329, 0.0
    %332 = vadd.xlane.f32.xlu0 %v331
    %v333 = vpop.xlane.xlu0 %332
    %v334 = vrot.slane %v333, 4
    %v335 = vadd.f32 %v333, %v334
    %v336 = vrot.slane %v335, 2
    %v337 = vadd.f32 %v335, %v336
    %v338 = vrot.slane %v337, 1
    %v339 = vadd.f32 %v337, %v338
    %s340 = vtos %v339
    %v341 = vstv %s340
    %v342 = vadd.f32 %v328, %v341
    %vm343 = vcmask 0
    %344 = vst.msk [vmem:[#allocation2] sm:$0x1] %vm343, %v342
    %v345 = vld [vmem:[#allocation3] sm:$0x1]
    %v346 = vsel %vm330, %v327, 0.0
    %347 = vadd.xlane.f32.xlu0 %v346
    %v348 = vpop.xlane.xlu0 %347
    %v349 = vrot.slane %v348, 4
    %v350 = vadd.f32 %v348, %v349
    %v351 = vrot.slane %v350, 2
    %v352 = vadd.f32 %v350, %v351
    %v353 = vrot.slane %v352, 1
    %v354 = vadd.f32 %v352, %v353
    %s355 = vtos %v354
    %v356 = vstv %s355
    %v357 = vadd.f32 %v345, %v356
    %358 = vst.msk [vmem:[#allocation3] sm:$0x1] %vm343, %v357
    %v360 = vlaneseq
    %v361 = vand.u32 %v360, 127
    %v362 = vperm.slane %v318, %v361
    %vm364 = vcmask 57344
    %365 = vst.msk [vmem:[#allocation8] sm:$0x1] %vm364, %v362
    %367 = vset.pattern.permute.xlu0 0
    %368 = vperm.xlu0 %367, %v248
    %v369 = vpop.permute.xlu0 %368
    %v370 = vperm.slane %v369, %v361
    %372 = vst.msk [vmem:[#allocation9] sm:$0x1] %vm364, %v370
    // Predicated region
    $region54: #{tpu_custom_call.1} parent=1 // pred_check
      %p373 = pneg %p48
    $region55: #{tpu_custom_call.1} parent=1 // pred_check_branch
      %375 = sbr.rel (%p373) target = $region57
    $region56: #{tpu_custom_call.1} parent=1 // pred_region
      %v376 = vld [vmem:[#allocation2] sm:$0x1]
      %v377 = vrsqrt.pop %v376
      %v378 = vmul.f32 %v377, %v376
      %v379 = vmul.f32 %v378, %v377
      %v380 = vmul.f32 0.5, %v379
      %v381 = vsub.f32 1.5, %v380
      %v382 = vmul.f32 %v377, %v381
      %v383 = vmul.f32 %v376, %v382
      %vm384 = vcmp.eq.f32.partialorder %v376, inf
      %v385 = vsel %vm384, %v376, %v383
      %vm386 = vcmp.eq.f32.partialorder %v376, 0.0
      %v387 = vand.u32 %v376, 2147483648
      %v388 = vsel %vm386, %v387, %v385
      %389 = vst.msk [vmem:[#allocation4] sm:$0x1] %vm343, %v388
      %v390 = vld [vmem:[#allocation3] sm:$0x1]
      %391 = vst.msk [vmem:[#allocation6] sm:$0x1] %vm343, %v390
    $region57: #{tpu_custom_call.1} parent=1 // pred_fallthru
      _
    // Predicated region
    $region58: #{tpu_custom_call.1} parent=1 // pred_check
      _
    $region59: #{tpu_custom_call.1} parent=1 // pred_check_branch
      %393 = sbr.rel (0) target = $region61
    $region60: #{tpu_custom_call.1} parent=1 // pred_region
      %395 = vsyncadd [#allocation5], 0
      %s397 = sshll.u32 [#allocation4], 4
      %s398 = int_to_ptr.vmem [resolvable:$true] %s397
      %s399 = sshll.u32 %s12, 4
      %s400 = int_to_ptr.hbm [resolvable:$true] %s399
      %402 = dma.vmem_to_hbm [thread:$0]  %s398, 16, %s400, [#allocation5]
    $region61: #{tpu_custom_call.1} parent=1 // pred_fallthru
      _
    // Predicated region
    $region62: #{tpu_custom_call.1} parent=1 // pred_check
      _
    $region63: #{tpu_custom_call.1} parent=1 // pred_check_branch
      %404 = sbr.rel (0) target = $region65
    $region64: #{tpu_custom_call.1} parent=1 // pred_region
      %406 = vsyncadd [#allocation7], 0
      %s408 = sshll.u32 [#allocation6], 4
      %s409 = int_to_ptr.vmem [resolvable:$true] %s408
      %s410 = sshll.u32 %s13, 4
      %s411 = int_to_ptr.hbm [resolvable:$true] %s410
      %413 = dma.vmem_to_hbm [thread:$0]  %s409, 16, %s411, [#allocation7]
    $region65: #{tpu_custom_call.1} parent=1 // pred_fallthru
      _
    // Predicated region
    $region66: #{tpu_custom_call.1} parent=1 // pred_check
      _
    $region67: #{tpu_custom_call.1} parent=1 // pred_check_branch
      %415 = sbr.rel (0) target = $region69
    $region68: #{tpu_custom_call.1} parent=1 // pred_region
      %417 = vsyncadd [#allocation7], 0
      %s419 = sshll.u32 [#allocation8], 4
      %s420 = int_to_ptr.vmem [resolvable:$true] %s419
      %s421 = sshll.u32 %s14, 4
      %s422 = int_to_ptr.hbm [resolvable:$true] %s421
      %424 = dma.vmem_to_hbm [thread:$0]  %s420, 16, %s422, [#allocation7]
    $region69: #{tpu_custom_call.1} parent=1 // pred_fallthru
      _
    // Predicated region
    $region70: #{tpu_custom_call.1} parent=1 // pred_check
      _
    $region71: #{tpu_custom_call.1} parent=1 // pred_check_branch
      %426 = sbr.rel (0) target = $region73
    $region72: #{tpu_custom_call.1} parent=1 // pred_region
      %428 = vsyncadd [#allocation10], 0
      %s430 = sshll.u32 [#allocation9], 4
      %s431 = int_to_ptr.vmem [resolvable:$true] %s430
      %s432 = sshll.u32 %s15, 4
      %s433 = int_to_ptr.hbm [resolvable:$true] %s432
      %435 = dma.vmem_to_hbm [thread:$0]  %s431, 16, %s433, [#allocation10]
    $region73: #{tpu_custom_call.1} parent=1 // pred_fallthru
      _
    // Predicated region
    $region74: #{tpu_custom_call.1} parent=1 // pred_check
      _
    $region75: #{tpu_custom_call.1} parent=1 // pred_check_branch
      %437 = sbr.rel (0) target = $region77
    $region76: #{tpu_custom_call.1} parent=1 // pred_region
      %439 = dma.done [#allocation5], 16
    $region77: #{tpu_custom_call.1} parent=1 // pred_fallthru
      _
    // Predicated region
    $region78: #{tpu_custom_call.1} parent=1 // pred_check
      _
    $region79: #{tpu_custom_call.1} parent=1 // pred_check_branch
      %441 = sbr.rel (0) target = $region81
    $region80: #{tpu_custom_call.1} parent=1 // pred_region
      %443 = dma.done [#allocation7], 16
    $region81: #{tpu_custom_call.1} parent=1 // pred_fallthru
      _
    // Predicated region
    $region82: #{tpu_custom_call.1} parent=1 // pred_check
      _
    $region83: #{tpu_custom_call.1} parent=1 // pred_check_branch
      %445 = sbr.rel (0) target = $region85
    $region84: #{tpu_custom_call.1} parent=1 // pred_region
      %447 = dma.done [#allocation7], 16
    $region85: #{tpu_custom_call.1} parent=1 // pred_fallthru
      _
    // Predicated region
    $region86: #{tpu_custom_call.1} parent=1 // pred_check
      _
    $region87: #{tpu_custom_call.1} parent=1 // pred_check_branch
      %449 = sbr.rel (0) target = $region89
    $region88: #{tpu_custom_call.1} parent=1 // pred_region
      %451 = dma.done [#allocation10], 16
    $region89: #{tpu_custom_call.1} parent=1 // pred_fallthru
      _
    %452 = vsyncpa [#allocation5], 1
    %453 = vsyncpa [#allocation7], 1
    %454 = vsyncpa [#allocation10], 1

</llo_original>
